<compile_context>
chip_gen: v7x
topology: tpu7x:2x2x1
jax: 0.10.0
libtpu: 0.0.40
codegen_flags: <defaults>
</compile_context>

<pallas_src>
import jax
import jax.numpy as jnp
from jax.experimental import pallas as pl
from jax.experimental.pallas import tpu as pltpu


def _mish(v):
    # mish(x) = x * tanh(softplus(x)); stable softplus = max(x,0) + log1p(exp(-|x|))
    sp = jnp.maximum(v, 0.0) + jnp.log1p(jnp.exp(-jnp.abs(v)))
    return v * jnp.tanh(sp)


def conv2d_mish_mish(x, weight, bias):
    """x: (N, Cin, H, W) f32, weight: (Cout, Cin, KH, KW), bias: (Cout,)."""
    N, Cin, H, W = x.shape
    Cout, _, KH, KW = weight.shape
    OH, OW = H - KH + 1, W - KW + 1
    HW = H * W

    # Flatten spatial dims; zero-pad the lane axis so every shifted window
    # x_flat[:, s : s + HW] (s up to (KH-1)*W + (KW-1)) stays in range and the
    # padded width is a multiple of 128 lanes.
    shift_max = (KH - 1) * W + (KW - 1)
    padw = ((HW + shift_max + 127) // 128) * 128
    x_flat = x.reshape(N, Cin, HW).astype(jnp.float32)
    x_pad = jnp.pad(x_flat, ((0, 0), (0, 0), (0, padw - HW)))

    # (Cout, Cin, KH, KW) -> (KH*KW, Cout, Cin): one small (Cout, Cin) matrix per
    # kernel tap, loaded with a clean sublane-aligned index inside the kernel.
    w_taps = jnp.transpose(weight, (2, 3, 0, 1)).reshape(KH * KW, Cout, Cin)
    w_taps = w_taps.astype(jnp.float32)
    b_col = bias.reshape(Cout, 1).astype(jnp.float32)

    def kernel(x_ref, w_ref, b_ref, o_ref):
        # x_ref: (1, Cin, padw), w_ref: (KH*KW, Cout, Cin), b_ref: (Cout, 1)
        # o_ref: (1, Cout, HW)
        xw = x_ref[0]                                    # (Cin, padw)
        acc = jnp.zeros((Cout, HW), jnp.float32)
        for kh in range(KH):                             # 9 shifted MXU matmuls
            for kw in range(KW):
                s = kh * W + kw
                slab = xw[:, s:s + HW]                   # (Cin, HW) static shift
                acc = acc + jnp.dot(w_ref[kh * KW + kw], slab,
                                    preferred_element_type=jnp.float32)
        y = acc + b_ref[...]                             # (Cout,1) lane broadcast
        o_ref[0] = _mish(_mish(y)).astype(o_ref.dtype)

    out_wide = pl.pallas_call(
        kernel,
        out_shape=jax.ShapeDtypeStruct((N, Cout, HW), jnp.float32),
        grid=(N,),
        in_specs=[
            pl.BlockSpec((1, Cin, padw), lambda n: (n, 0, 0)),
            pl.BlockSpec((KH * KW, Cout, Cin), lambda n: (0, 0, 0)),
            pl.BlockSpec((Cout, 1), lambda n: (0, 0)),
        ],
        out_specs=pl.BlockSpec((1, Cout, HW), lambda n: (n, 0, 0)),
        compiler_params=pltpu.CompilerParams(
            dimension_semantics=("parallel",)),
        cost_estimate=pl.CostEstimate(
            flops=2 * N * Cout * Cin * KH * KW * HW,
            transcendentals=6 * N * Cout * HW,
            bytes_accessed=4 * (N * Cin * padw + KH * KW * Cout * Cin
                                + Cout + N * Cout * HW)),
    )(x_pad, w_taps, b_col)

    # (N, Cout, H*W) -> (N, Cout, H, W) is a free reshape; crop the valid window.
    return out_wide.reshape(N, Cout, H, W)[:, :, :OH, :OW]


def _reference(x, weight, bias):
    y = jax.lax.conv_general_dilated(
        x, weight, window_strides=(1, 1), padding="VALID",
        dimension_numbers=("NCHW", "OIHW", "NCHW"))
    y = y + bias.reshape(1, -1, 1, 1)
    return _mish(_mish(y))


if __name__ == "__main__":
    key = jax.random.PRNGKey(0)
    k_x, k_w, k_b = jax.random.split(key, 3)

    # small shapes consistent with the module: batch=2, Cin=4, Cout=8, 16x16, k=3
    N, Cin, Cout, H, W, KS = 2, 4, 8, 16, 16, 3
    x = jax.random.normal(k_x, (N, Cin, H, W), dtype=jnp.float32)

    # PyTorch Conv2d default init: U(-s, s), s = 1/sqrt(fan_in)
    fan_in = Cin * KS * KS
    s = 1.0 / jnp.sqrt(jnp.float32(fan_in))
    weight = jax.random.uniform(k_w, (Cout, Cin, KS, KS),
                                minval=-s, maxval=s, dtype=jnp.float32)
    bias = jax.random.uniform(k_b, (Cout,), minval=-s, maxval=s,
                              dtype=jnp.float32)

    out = jax.jit(conv2d_mish_mish)(x, weight, bias)
    out = jax.block_until_ready(out)

    ref = _reference(x, weight, bias)
    assert out.shape == (N, Cout, H - KS + 1, W - KS + 1)
    assert jnp.allclose(out, ref, atol=1e-4, rtol=1e-4)

    print("KERNEL_OK")
</pallas_src>

<mosaic_0001>
module attributes {stable_mosaic.version = 11 : i64} {
  func.func @kernel(%arg0: i32, %arg1: memref<1x4x384xf32, #tpu.memory_space<vmem>>, %arg2: memref<9x8x4xf32, #tpu.memory_space<vmem>>, %arg3: memref<8x1xf32, #tpu.memory_space<vmem>>, %arg4: memref<1x8x256xf32, #tpu.memory_space<vmem>>) attributes {dimension_semantics = [#tpu.dimension_semantics<parallel>], iteration_bounds = array<i64: 2>, scalar_prefetch = 0 : i64, scratch_operands = 0 : i64, tpu.core_type = #tpu.core_type<tc>, window_params = [{transform_indices = @transform_0, window_bounds = array<i64: 1, 4, 384>}, {pipeline_mode = #tpu.pipeline_mode<synchronous>, transform_indices = @transform_1, window_bounds = array<i64: 9, 8, 4>}, {pipeline_mode = #tpu.pipeline_mode<synchronous>, transform_indices = @transform_2, window_bounds = array<i64: 8, 1>}, {transform_indices = @transform_3, window_bounds = array<i64: 1, 8, 256>}]} {
    %c0 = arith.constant 0 : index
    %c0_0 = arith.constant 0 : index
    %c0_1 = arith.constant 0 : index
    %0 = vector.load %arg1[%c0, %c0_0, %c0_1] : memref<1x4x384xf32, #tpu.memory_space<vmem>>, vector<1x4x384xf32>
    %1 = vector.shape_cast %0 : vector<1x4x384xf32> to vector<4x384xf32>
    %cst = arith.constant 0.000000e+00 : f32
    %2 = vector.broadcast %cst : f32 to vector<8x256xf32>
    %3 = vector.extract_strided_slice %1 {offsets = [0, 0], sizes = [4, 256], strides = [1, 1]} : vector<4x384xf32> to vector<4x256xf32>
    %c0_2 = arith.constant 0 : index
    %c0_3 = arith.constant 0 : index
    %c0_4 = arith.constant 0 : index
    %4 = vector.load %arg2[%c0_2, %c0_3, %c0_4] : memref<9x8x4xf32, #tpu.memory_space<vmem>>, vector<1x8x4xf32>
    %5 = vector.shape_cast %4 : vector<1x8x4xf32> to vector<8x4xf32>
    %cst_5 = arith.constant dense<0.000000e+00> : vector<8x256xf32>
    %6 = tpu.matmul %5, %3, %cst_5 {dimension_numbers = #tpu.dot_dimension_numbers<[1], [0], [0], [1], [0, 0, 1, 1], [], []>} : vector<8x4xf32>, vector<4x256xf32>, vector<8x256xf32> -> vector<8x256xf32>
    %7 = arith.addf %2, %6 : vector<8x256xf32>
    %8 = vector.extract_strided_slice %1 {offsets = [0, 1], sizes = [4, 256], strides = [1, 1]} : vector<4x384xf32> to vector<4x256xf32>
    %c1 = arith.constant 1 : index
    %c0_6 = arith.constant 0 : index
    %c0_7 = arith.constant 0 : index
    %9 = vector.load %arg2[%c1, %c0_6, %c0_7] : memref<9x8x4xf32, #tpu.memory_space<vmem>>, vector<1x8x4xf32>
    %10 = vector.shape_cast %9 : vector<1x8x4xf32> to vector<8x4xf32>
    %cst_8 = arith.constant dense<0.000000e+00> : vector<8x256xf32>
    %11 = tpu.matmul %10, %8, %cst_8 {dimension_numbers = #tpu.dot_dimension_numbers<[1], [0], [0], [1], [0, 0, 1, 1], [], []>} : vector<8x4xf32>, vector<4x256xf32>, vector<8x256xf32> -> vector<8x256xf32>
    %12 = arith.addf %7, %11 : vector<8x256xf32>
    %13 = vector.extract_strided_slice %1 {offsets = [0, 2], sizes = [4, 256], strides = [1, 1]} : vector<4x384xf32> to vector<4x256xf32>
    %c2 = arith.constant 2 : index
    %c0_9 = arith.constant 0 : index
    %c0_10 = arith.constant 0 : index
    %14 = vector.load %arg2[%c2, %c0_9, %c0_10] : memref<9x8x4xf32, #tpu.memory_space<vmem>>, vector<1x8x4xf32>
    %15 = vector.shape_cast %14 : vector<1x8x4xf32> to vector<8x4xf32>
    %cst_11 = arith.constant dense<0.000000e+00> : vector<8x256xf32>
    %16 = tpu.matmul %15, %13, %cst_11 {dimension_numbers = #tpu.dot_dimension_numbers<[1], [0], [0], [1], [0, 0, 1, 1], [], []>} : vector<8x4xf32>, vector<4x256xf32>, vector<8x256xf32> -> vector<8x256xf32>
    %17 = arith.addf %12, %16 : vector<8x256xf32>
    %18 = vector.extract_strided_slice %1 {offsets = [0, 16], sizes = [4, 256], strides = [1, 1]} : vector<4x384xf32> to vector<4x256xf32>
    %c3 = arith.constant 3 : index
    %c0_12 = arith.constant 0 : index
    %c0_13 = arith.constant 0 : index
    %19 = vector.load %arg2[%c3, %c0_12, %c0_13] : memref<9x8x4xf32, #tpu.memory_space<vmem>>, vector<1x8x4xf32>
    %20 = vector.shape_cast %19 : vector<1x8x4xf32> to vector<8x4xf32>
    %cst_14 = arith.constant dense<0.000000e+00> : vector<8x256xf32>
    %21 = tpu.matmul %20, %18, %cst_14 {dimension_numbers = #tpu.dot_dimension_numbers<[1], [0], [0], [1], [0, 0, 1, 1], [], []>} : vector<8x4xf32>, vector<4x256xf32>, vector<8x256xf32> -> vector<8x256xf32>
    %22 = arith.addf %17, %21 : vector<8x256xf32>
    %23 = vector.extract_strided_slice %1 {offsets = [0, 17], sizes = [4, 256], strides = [1, 1]} : vector<4x384xf32> to vector<4x256xf32>
    %c4 = arith.constant 4 : index
    %c0_15 = arith.constant 0 : index
    %c0_16 = arith.constant 0 : index
    %24 = vector.load %arg2[%c4, %c0_15, %c0_16] : memref<9x8x4xf32, #tpu.memory_space<vmem>>, vector<1x8x4xf32>
    %25 = vector.shape_cast %24 : vector<1x8x4xf32> to vector<8x4xf32>
    %cst_17 = arith.constant dense<0.000000e+00> : vector<8x256xf32>
    %26 = tpu.matmul %25, %23, %cst_17 {dimension_numbers = #tpu.dot_dimension_numbers<[1], [0], [0], [1], [0, 0, 1, 1], [], []>} : vector<8x4xf32>, vector<4x256xf32>, vector<8x256xf32> -> vector<8x256xf32>
    %27 = arith.addf %22, %26 : vector<8x256xf32>
    %28 = vector.extract_strided_slice %1 {offsets = [0, 18], sizes = [4, 256], strides = [1, 1]} : vector<4x384xf32> to vector<4x256xf32>
    %c5 = arith.constant 5 : index
    %c0_18 = arith.constant 0 : index
    %c0_19 = arith.constant 0 : index
    %29 = vector.load %arg2[%c5, %c0_18, %c0_19] : memref<9x8x4xf32, #tpu.memory_space<vmem>>, vector<1x8x4xf32>
    %30 = vector.shape_cast %29 : vector<1x8x4xf32> to vector<8x4xf32>
    %cst_20 = arith.constant dense<0.000000e+00> : vector<8x256xf32>
    %31 = tpu.matmul %30, %28, %cst_20 {dimension_numbers = #tpu.dot_dimension_numbers<[1], [0], [0], [1], [0, 0, 1, 1], [], []>} : vector<8x4xf32>, vector<4x256xf32>, vector<8x256xf32> -> vector<8x256xf32>
    %32 = arith.addf %27, %31 : vector<8x256xf32>
    %33 = vector.extract_strided_slice %1 {offsets = [0, 32], sizes = [4, 256], strides = [1, 1]} : vector<4x384xf32> to vector<4x256xf32>
    %c6 = arith.constant 6 : index
    %c0_21 = arith.constant 0 : index
    %c0_22 = arith.constant 0 : index
    %34 = vector.load %arg2[%c6, %c0_21, %c0_22] : memref<9x8x4xf32, #tpu.memory_space<vmem>>, vector<1x8x4xf32>
    %35 = vector.shape_cast %34 : vector<1x8x4xf32> to vector<8x4xf32>
    %cst_23 = arith.constant dense<0.000000e+00> : vector<8x256xf32>
    %36 = tpu.matmul %35, %33, %cst_23 {dimension_numbers = #tpu.dot_dimension_numbers<[1], [0], [0], [1], [0, 0, 1, 1], [], []>} : vector<8x4xf32>, vector<4x256xf32>, vector<8x256xf32> -> vector<8x256xf32>
    %37 = arith.addf %32, %36 : vector<8x256xf32>
    %38 = vector.extract_strided_slice %1 {offsets = [0, 33], sizes = [4, 256], strides = [1, 1]} : vector<4x384xf32> to vector<4x256xf32>
    %c7 = arith.constant 7 : index
    %c0_24 = arith.constant 0 : index
    %c0_25 = arith.constant 0 : index
    %39 = vector.load %arg2[%c7, %c0_24, %c0_25] : memref<9x8x4xf32, #tpu.memory_space<vmem>>, vector<1x8x4xf32>
    %40 = vector.shape_cast %39 : vector<1x8x4xf32> to vector<8x4xf32>
    %cst_26 = arith.constant dense<0.000000e+00> : vector<8x256xf32>
    %41 = tpu.matmul %40, %38, %cst_26 {dimension_numbers = #tpu.dot_dimension_numbers<[1], [0], [0], [1], [0, 0, 1, 1], [], []>} : vector<8x4xf32>, vector<4x256xf32>, vector<8x256xf32> -> vector<8x256xf32>
    %42 = arith.addf %37, %41 : vector<8x256xf32>
    %43 = vector.extract_strided_slice %1 {offsets = [0, 34], sizes = [4, 256], strides = [1, 1]} : vector<4x384xf32> to vector<4x256xf32>
    %c8 = arith.constant 8 : index
    %c0_27 = arith.constant 0 : index
    %c0_28 = arith.constant 0 : index
    %44 = vector.load %arg2[%c8, %c0_27, %c0_28] : memref<9x8x4xf32, #tpu.memory_space<vmem>>, vector<1x8x4xf32>
    %45 = vector.shape_cast %44 : vector<1x8x4xf32> to vector<8x4xf32>
    %cst_29 = arith.constant dense<0.000000e+00> : vector<8x256xf32>
    %46 = tpu.matmul %45, %43, %cst_29 {dimension_numbers = #tpu.dot_dimension_numbers<[1], [0], [0], [1], [0, 0, 1, 1], [], []>} : vector<8x4xf32>, vector<4x256xf32>, vector<8x256xf32> -> vector<8x256xf32>
    %47 = arith.addf %42, %46 : vector<8x256xf32>
    %c0_30 = arith.constant 0 : index
    %c0_31 = arith.constant 0 : index
    %48 = vector.load %arg3[%c0_30, %c0_31] : memref<8x1xf32, #tpu.memory_space<vmem>>, vector<8x1xf32>
    %49 = vector.broadcast %48 : vector<8x1xf32> to vector<8x256xf32>
    %50 = arith.addf %47, %49 : vector<8x256xf32>
    %cst_32 = arith.constant 0.000000e+00 : f32
    %51 = vector.broadcast %cst_32 : f32 to vector<8x256xf32>
    %52 = arith.maximumf %50, %51 : vector<8x256xf32>
    %53 = math.absf %50 : vector<8x256xf32>
    %cst_33 = arith.constant 0.000000e+00 : f32
    %54 = vector.broadcast %cst_33 : f32 to vector<8x256xf32>
    %55 = arith.subf %54, %53 : vector<8x256xf32>
    %56 = math.exp %55 : vector<8x256xf32>
    %57 = math.log1p %56 : vector<8x256xf32>
    %58 = arith.addf %52, %57 : vector<8x256xf32>
    %59 = math.tanh %58 : vector<8x256xf32>
    %60 = arith.mulf %50, %59 : vector<8x256xf32>
    %cst_34 = arith.constant 0.000000e+00 : f32
    %61 = vector.broadcast %cst_34 : f32 to vector<8x256xf32>
    %62 = arith.maximumf %60, %61 : vector<8x256xf32>
    %63 = math.absf %60 : vector<8x256xf32>
    %cst_35 = arith.constant 0.000000e+00 : f32
    %64 = vector.broadcast %cst_35 : f32 to vector<8x256xf32>
    %65 = arith.subf %64, %63 : vector<8x256xf32>
    %66 = math.exp %65 : vector<8x256xf32>
    %67 = math.log1p %66 : vector<8x256xf32>
    %68 = arith.addf %62, %67 : vector<8x256xf32>
    %69 = math.tanh %68 : vector<8x256xf32>
    %70 = arith.mulf %60, %69 : vector<8x256xf32>
    %c0_36 = arith.constant 0 : index
    %c0_37 = arith.constant 0 : index
    %c0_38 = arith.constant 0 : index
    %71 = vector.load %arg4[%c0_36, %c0_37, %c0_38] : memref<1x8x256xf32, #tpu.memory_space<vmem>>, vector<1x8x256xf32>
    %72 = vector.shape_cast %71 : vector<1x8x256xf32> to vector<8x256xf32>
    %73 = vector.shape_cast %70 : vector<8x256xf32> to vector<1x8x256xf32>
    tpu.vector_store %arg4[%c0_36, %c0_37, %c0_38], %73 {strides = array<i32>} : memref<1x8x256xf32, #tpu.memory_space<vmem>>, vector<1x8x256xf32>,
    return
  }
  func.func @transform_0(%arg0: i32) -> (i32, i32, i32) {
    %c0_i32 = arith.constant 0 : i32
    %c0_i32_0 = arith.constant 0 : i32
    %c0_i32_1 = arith.constant 0 : i32
    return %arg0, %c0_i32, %c0_i32_0 : i32, i32, i32
  }
  func.func @transform_1(%arg0: i32) -> (i32, i32, i32) {
    %c0_i32 = arith.constant 0 : i32
    %c0_i32_0 = arith.constant 0 : i32
    %c0_i32_1 = arith.constant 0 : i32
    %c0_i32_2 = arith.constant 0 : i32
    return %c0_i32, %c0_i32_0, %c0_i32_1 : i32, i32, i32
  }
  func.func @transform_2(%arg0: i32) -> (i32, i32) {
    %c0_i32 = arith.constant 0 : i32
    %c0_i32_0 = arith.constant 0 : i32
    %c0_i32_1 = arith.constant 0 : i32
    return %c0_i32, %c0_i32_0 : i32, i32
  }
  func.func @transform_3(%arg0: i32) -> (i32, i32, i32) {
    %c0_i32 = arith.constant 0 : i32
    %c0_i32_0 = arith.constant 0 : i32
    %c0_i32_1 = arith.constant 0 : i32
    return %arg0, %c0_i32, %c0_i32_0 : i32, i32, i32
  }
}

</mosaic_0001>

<llo_original>
// kernel: conv2d_mish_mish.1
$region0: #{conv2d_mish_mish.1}
  #allocation0 [shape = 'u32[]', space=smem, size = 0x4, offset = 0x4, fixed_abs, tag = 'smem constant byte address 0x4 - core index']
  #allocation1 [shape = 'u32[144,128]{1,0:T(1,128)}', space=vmem, size = 0x12000, scoped, tag = 'internal scratch']
  %s0 = inlined_call_operand.vmem [shape: f32[2,4,384], index: 0, kind: input, shape index: {}]
  %s1 = inlined_call_operand.vmem [shape: f32[9,8,4], index: 1, kind: input, shape index: {}]
  %s2 = inlined_call_operand.vmem [shape: f32[8,1], index: 2, kind: input, shape index: {}]
  %s3 = inlined_call_operand.vmem [shape: f32[2,8,256], index: 3, kind: output, shape index: {}]
  %s4 = sld [smem:[#allocation0]]
  $region45: #{conv2d_mish_mish.1} parent=0
    _
  %s6 = ssub.s32 1, %s4
  %s7 = scalar_select 0, %s6, %s4
  loop: start=0, step=1, limit=4
  $region2: #{conv2d_mish_mish.1} parent=0 // loop_pre_header
    _
  $region3: #{conv2d_mish_mish.1} parent=0 // loop_header
    %s9 = sphi 0, %s13
    %p10 = scmp.ge.s32.totalorder %s9, 4
    %s19 = sphi 0, %s21
    %s22 = sphi 0, %s19
    %s23 = sphi 0, %s22
    %s39 = sphi 0, %s23
    %s43 = sphi 0, %s43
    %s45 = sphi 0, %s43
    %s46 = sphi 0, %s45
    %s60 = sphi 0, %s46
    %s64 = sphi 0, %s64
    %s66 = sphi 0, %s64
    %s67 = sphi 0, %s66
    %s81 = sphi 0, %s67
    %s87 = sphi 0, %s89
    %s90 = sphi 0, %s87
    %s91 = sphi 0, %s90
    %s107 = sphi 0, %s91
  $region4: #{conv2d_mish_mish.1} parent=0 // loop_header_branch
    %12 = sbr.rel (%p10) target = $region8
  $region5: #{conv2d_mish_mish.1} parent=0 // loop_body
    %s14 = ssub.s32 %s9, 1
    %s15 = ssub.s32 %s9, 2
    %s16 = sadd.s32 %s9, 1
    %s17 = ssub.s32 %s9, %s16
    %p18 = scmp.eq.s32.totalorder %s17, 0
    %s20 = sadd.s32 %s19, 1
    %s21 = scalar_select %p18, %s19, %s20
    %p24 = pneg %p18
    %p25 = scmp.eq.s32.totalorder %s9, 1
    %p26 = por %p24, %p25
    %p27 = scmp.ne.s32.totalorder %s19, %s22
    %p28 = scmp.eq.s32.totalorder %s9, 0
    %p29 = por %p27, %p28
    %p30 = scmp.ne.s32.totalorder %s19, %s22
    %p31 = scmp.eq.s32.totalorder %s14, 1
    %p32 = por %p30, %p31
    %p33 = scmp.ne.s32.totalorder %s22, %s23
    %p34 = scmp.eq.s32.totalorder %s14, 0
    %p35 = por %p33, %p34
    %p36 = scmp.ne.s32.totalorder %s22, %s23
    %p37 = scmp.eq.s32.totalorder %s15, 1
    %p38 = por %p36, %p37
    %p40 = scmp.ne.s32.totalorder %s23, %s39
    %p41 = scmp.eq.s32.totalorder %s15, 0
    %p42 = por %p40, %p41
    %s44 = sadd.s32 %s43, 1
    %p47 = scmp.eq.s32.totalorder %s9, 1
    %p48 = scmp.ne.s32.totalorder %s43, %s45
    %p49 = scmp.eq.s32.totalorder %s9, 0
    %p50 = por %p48, %p49
    %p51 = scmp.ne.s32.totalorder %s43, %s45
    %p52 = scmp.eq.s32.totalorder %s14, 1
    %p53 = por %p51, %p52
    %p54 = scmp.ne.s32.totalorder %s45, %s46
    %p55 = scmp.eq.s32.totalorder %s14, 0
    %p56 = por %p54, %p55
    %p57 = scmp.ne.s32.totalorder %s45, %s46
    %p58 = scmp.eq.s32.totalorder %s15, 1
    %p59 = por %p57, %p58
    %p61 = scmp.ne.s32.totalorder %s46, %s60
    %p62 = scmp.eq.s32.totalorder %s15, 0
    %p63 = por %p61, %p62
    %s65 = sadd.s32 %s64, 1
    %p68 = scmp.eq.s32.totalorder %s9, 1
    %p69 = scmp.ne.s32.totalorder %s64, %s66
    %p70 = scmp.eq.s32.totalorder %s9, 0
    %p71 = por %p69, %p70
    %p72 = scmp.ne.s32.totalorder %s64, %s66
    %p73 = scmp.eq.s32.totalorder %s14, 1
    %p74 = por %p72, %p73
    %p75 = scmp.ne.s32.totalorder %s66, %s67
    %p76 = scmp.eq.s32.totalorder %s14, 0
    %p77 = por %p75, %p76
    %p78 = scmp.ne.s32.totalorder %s66, %s67
    %p79 = scmp.eq.s32.totalorder %s15, 1
    %p80 = por %p78, %p79
    %p82 = scmp.ne.s32.totalorder %s67, %s81
    %p83 = scmp.eq.s32.totalorder %s15, 0
    %p84 = por %p82, %p83
    %s85 = ssub.s32 %s9, %s16
    %p86 = scmp.eq.s32.totalorder %s85, 0
    %s88 = sadd.s32 %s87, 1
    %s89 = scalar_select %p86, %s87, %s88
    %p92 = pneg %p86
    %p93 = scmp.eq.s32.totalorder %s9, 1
    %p94 = por %p92, %p93
    %p95 = scmp.ne.s32.totalorder %s87, %s90
    %p96 = scmp.eq.s32.totalorder %s9, 0
    %p97 = por %p95, %p96
    %p98 = scmp.ne.s32.totalorder %s87, %s90
    %p99 = scmp.eq.s32.totalorder %s14, 1
    %p100 = por %p98, %p99
    %p101 = scmp.ne.s32.totalorder %s90, %s91
    %p102 = scmp.eq.s32.totalorder %s14, 0
    %p103 = por %p101, %p102
    %p104 = scmp.ne.s32.totalorder %s90, %s91
    %p105 = scmp.eq.s32.totalorder %s15, 1
    %p106 = por %p104, %p105
    %p108 = scmp.ne.s32.totalorder %s91, %s107
    %p109 = scmp.eq.s32.totalorder %s15, 0
    %p110 = por %p108, %p109
    %p111 = scmp.le.s32.totalorder 1, %s9
    %p112 = scmp.lt.s32.totalorder %s9, 3
    %p113 = pnand %p111, %p112
    %p114 = pneg %p113
    // Predicated region
    $region9: #{conv2d_mish_mish.1} parent=5 // pred_check
      _
    $region10: #{conv2d_mish_mish.1} parent=5 // pred_check_branch
      %116 = sbr.rel (%p113) target = $region12
    $region11: #{conv2d_mish_mish.1} parent=5 // pred_region
      %s117 = ssub.s32 %s9, 1
      // Predicated region
      $region13: #{conv2d_mish_mish.1} parent=11 // pred_check
        %p118 = pneg %p56
      $region14: #{conv2d_mish_mish.1} parent=11 // pred_check_branch
        %120 = sbr.rel (%p118) target = $region16
      $region15: #{conv2d_mish_mish.1} parent=11 // pred_region
        _
      $region16: #{conv2d_mish_mish.1} parent=11 // pred_fallthru
        _
      // Predicated region
      $region17: #{conv2d_mish_mish.1} parent=11 // pred_check
        %p121 = pneg %p77
      $region18: #{conv2d_mish_mish.1} parent=11 // pred_check_branch
        %123 = sbr.rel (%p121) target = $region20
      $region19: #{conv2d_mish_mish.1} parent=11 // pred_region
        _
      $region20: #{conv2d_mish_mish.1} parent=11 // pred_fallthru
        _
    $region12: #{conv2d_mish_mish.1} parent=5 // pred_fallthru
      _
    %p124 = scmp.lt.s32.totalorder %s9, 2
    // Predicated region
    $region21: #{conv2d_mish_mish.1} parent=5 // pred_check
      %p125 = pneg %p124
    $region22: #{conv2d_mish_mish.1} parent=5 // pred_check_branch
      %127 = sbr.rel (%p125) target = $region24
    $region23: #{conv2d_mish_mish.1} parent=5 // pred_region
      // Predicated region
      $region25: #{conv2d_mish_mish.1} parent=23 // pred_check
        %p128 = pneg %p29
      $region26: #{conv2d_mish_mish.1} parent=23 // pred_check_branch
        %130 = sbr.rel (%p128) target = $region28
      $region27: #{conv2d_mish_mish.1} parent=23 // pred_region
        %p131 = scmp.lt.s32.totalorder %s9, 1
        %s132 = scalar_select %p131, %s9, 1
        %s133 = smul.addr %s132, 3
        %s134 = smul.addr %s133, 4
        %s135 = scalar_lea.vmem %s0, %s134
      $region28: #{conv2d_mish_mish.1} parent=23 // pred_fallthru
        _
    $region24: #{conv2d_mish_mish.1} parent=5 // pred_fallthru
      _
    %p136 = scmp.le.s32.totalorder 1, %s9
    %p137 = scmp.lt.s32.totalorder %s9, 3
    %p138 = pnand %p136, %p137
    %p139 = pneg %p138
    // Predicated region
    $region29: #{conv2d_mish_mish.1} parent=5 // pred_check
      _
    $region30: #{conv2d_mish_mish.1} parent=5 // pred_check_branch
      %141 = sbr.rel (%p138) target = $region32
    $region31: #{conv2d_mish_mish.1} parent=5 // pred_region
      %s142 = ssub.s32 %s9, 1
      %p143 = scmp.lt.s32.totalorder %s14, 1
      %s144 = scalar_select %p143, %s14, 1
      %s145 = smul.addr %s144, 3
      %s146 = smul.addr %s145, 4
      %s147 = scalar_lea.vmem %s0, %s146
      %p148 = pneg %p35
      %p149 = pneg %p32
      %p150 = pneg %p56
      %p151 = pneg %p53
      %p152 = pneg %p77
      %p153 = pneg %p74
      %p154 = pneg %p103
      %p155 = pneg %p100
      %p156 = scmp.lt.s32.totalorder %s14, 1
      %s157 = scalar_select %p156, %s14, 1
      %s158 = smul.addr %s157, 2
      %s159 = smul.addr %s158, 8
      %s160 = scalar_lea.vmem %s3, %s159
      %p161 = scmp.lt.s32.totalorder %s14, 1
      %s162 = scalar_select %p161, %s14, 1
      %s163 = smul.addr %s162, 3
      %s164 = smul.addr %s163, 4
      %s165 = scalar_lea.vmem %s0, %s164
      %p166 = scmp.lt.s32.totalorder %s14, 1
      %s167 = scalar_select %p166, %s14, 1
      %s168 = smul.addr %s167, 2
      %s169 = smul.addr %s168, 8
      %s170 = scalar_lea.vmem %s3, %s169
      %v171 = vld [vmem:[%s165] sm:$0xff]
      %v172 = vld [vmem:[%s165 + $0x8] sm:$0xf]
      %v173 = vld [vmem:[%s1] sm:$0xff]
      %s174 = scalar_lea.vmem %s1, 8
      %v175 = vld [vmem:[%s174] sm:$0xff]
      %v178 = vcombine.high %v171, %v171
      %179 = vrot.lane.b32.xlu0 %v171, 127
      %v180 = vpop.permute.xlu0 %179
      %181 = vrot.lane.b32.xlu0 %v178, 127
      %v182 = vpop.permute.xlu0 %181
      %183 = vrot.lane.b32.xlu0 %v172, 127
      %v184 = vpop.permute.xlu0 %183
      %vm185 = vcmask 1039360
      %v186 = vsel %vm185, %v180, %v182
      %v187 = vsel %vm185, %v182, %v184
      %vm188 = vcmask 31744
      %v190 = vsel %vm188, %v175, 0
      %vm192 = vcmask 1043456
      %v193 = vsel %vm192, %v186, 0
      %v195 = vsel %vm192, %v187, 0
      %197 = vmatprep.subr.mxu0 %v195
      %198 = vmatpush1.msra.mxu0 %v193
      %199 = vmatprep.subr.mxu0 0.0
      %200 = vmatpush1.msra.mxu0 0.0
      %201 = vmatprep.subr.mxu0 0.0
      %202 = vmatpush1.msra.mxu0 0.0
      %203 = vmatprep.subr.mxu0 0.0
      %204 = vmatpush1.msra.mxu0 0.0
      %205 = vmatprep.subr.mxu0 0.0
      %206 = vmatpush1.msra.mxu0 0.0
      %207 = vmatprep.subr.mxu0 0.0
      %208 = vmatpush1.msra.mxu0 0.0
      %209 = vmatprep.subr.mxu0 0.0
      %210 = vmatpush1.msra.mxu0 0.0
      %211 = vmatprep.subr.mxu0 0.0
      %212 = vmatpush1.msra.mxu0 0.0
      %213 = vmatprep.subr.mxu0 0.0
      %214 = vmatpush1.msra.mxu0 0.0
      %215 = vmatprep.subr.mxu0 0.0
      %216 = vmatpush1.msra.mxu0 0.0
      %217 = vmatprep.subr.mxu0 0.0
      %218 = vmatpush1.msra.mxu0 0.0
      %219 = vmatprep.subr.mxu0 0.0
      %220 = vmatpush1.msra.mxu0 0.0
      %221 = vmatprep.subr.mxu0 0.0
      %222 = vmatpush1.msra.mxu0 0.0
      %223 = vmatprep.subr.mxu0 0.0
      %224 = vmatpush1.msra.mxu0 0.0
      %225 = vmatprep.subr.mxu0 0.0
      %226 = vmatpush1.msra.mxu0 0.0
      %227 = vmatprep.subr.mxu0 0.0
      %228 = vmatpush1.msra.mxu0 0.0
      %229 = vmatprep.subr.mxu0 0.0
      %230 = vmatpush1.msra.mxu0 0.0
      %231 = vmatprep.subr.mxu0 0.0
      %232 = vmatpush1.msra.mxu0 0.0
      %233 = vmatprep.subr.mxu0 0.0
      %234 = vmatpush1.msra.mxu0 0.0
      %235 = vmatprep.subr.mxu0 0.0
      %236 = vmatpush1.msra.mxu0 0.0
      %237 = vmatprep.subr.mxu0 0.0
      %238 = vmatpush1.msra.mxu0 0.0
      %239 = vmatprep.subr.mxu0 0.0
      %240 = vmatpush1.msra.mxu0 0.0
      %241 = vmatprep.subr.mxu0 0.0
      %242 = vmatpush1.msra.mxu0 0.0
      %243 = vmatprep.subr.mxu0 0.0
      %244 = vmatpush1.msra.mxu0 0.0
      %245 = vmatprep.subr.mxu0 0.0
      %246 = vmatpush1.msra.mxu0 0.0
      %247 = vmatprep.subr.mxu0 0.0
      %248 = vmatpush1.msra.mxu0 0.0
      %249 = vmatprep.subr.mxu0 0.0
      %250 = vmatpush1.msra.mxu0 0.0
      %251 = vmatprep.subr.mxu0 0.0
      %252 = vmatpush1.msra.mxu0 0.0
      %253 = vmatprep.subr.mxu0 0.0
      %254 = vmatpush1.msra.mxu0 0.0
      %255 = vmatprep.subr.mxu0 0.0
      %256 = vmatpush1.msra.mxu0 0.0
      %257 = vmatprep.subr.mxu0 0.0
      %258 = vmatpush1.msra.mxu0 0.0
      %259 = vmatprep.subr.mxu0 0.0
      %260 = vmatpush1.msra.mxu0 0.0
      %261 = vmatprep.mubr.f32.mxu0 0.0
      %262 = vmatmul.mubr.f32.gmra.mrb[0].mxu0 %v190
      %v263 = vpop.f32.mrb[0].mxu0
      %v264 = vadd.f32 0.0, %v263
      %v265 = vpop.f32.mrb[0].mxu0
      %v266 = vadd.f32 0.0, %v265
      %267 = vdwg.mxu0
      %v269 = vsel %vm188, %v173, 0
      %v271 = vsel %vm192, %v171, 0
      %v273 = vsel %vm192, %v178, 0
      %275 = vmatprep.subr.mxu0 %v273
      %276 = vmatpush1.msra.mxu0 %v271
      %277 = vmatprep.subr.mxu0 0.0
      %278 = vmatpush1.msra.mxu0 0.0
      %279 = vmatprep.subr.mxu0 0.0
      %280 = vmatpush1.msra.mxu0 0.0
      %281 = vmatprep.subr.mxu0 0.0
      %282 = vmatpush1.msra.mxu0 0.0
      %283 = vmatprep.subr.mxu0 0.0
      %284 = vmatpush1.msra.mxu0 0.0
      %285 = vmatprep.subr.mxu0 0.0
      %286 = vmatpush1.msra.mxu0 0.0
      %287 = vmatprep.subr.mxu0 0.0
      %288 = vmatpush1.msra.mxu0 0.0
      %289 = vmatprep.subr.mxu0 0.0
      %290 = vmatpush1.msra.mxu0 0.0
      %291 = vmatprep.subr.mxu0 0.0
      %292 = vmatpush1.msra.mxu0 0.0
      %293 = vmatprep.subr.mxu0 0.0
      %294 = vmatpush1.msra.mxu0 0.0
      %295 = vmatprep.subr.mxu0 0.0
      %296 = vmatpush1.msra.mxu0 0.0
      %297 = vmatprep.subr.mxu0 0.0
      %298 = vmatpush1.msra.mxu0 0.0
      %299 = vmatprep.subr.mxu0 0.0
      %300 = vmatpush1.msra.mxu0 0.0
      %301 = vmatprep.subr.mxu0 0.0
      %302 = vmatpush1.msra.mxu0 0.0
      %303 = vmatprep.subr.mxu0 0.0
      %304 = vmatpush1.msra.mxu0 0.0
      %305 = vmatprep.subr.mxu0 0.0
      %306 = vmatpush1.msra.mxu0 0.0
      %307 = vmatprep.subr.mxu0 0.0
      %308 = vmatpush1.msra.mxu0 0.0
      %309 = vmatprep.subr.mxu0 0.0
      %310 = vmatpush1.msra.mxu0 0.0
      %311 = vmatprep.subr.mxu0 0.0
      %312 = vmatpush1.msra.mxu0 0.0
      %313 = vmatprep.subr.mxu0 0.0
      %314 = vmatpush1.msra.mxu0 0.0
      %315 = vmatprep.subr.mxu0 0.0
      %316 = vmatpush1.msra.mxu0 0.0
      %317 = vmatprep.subr.mxu0 0.0
      %318 = vmatpush1.msra.mxu0 0.0
      %319 = vmatprep.subr.mxu0 0.0
      %320 = vmatpush1.msra.mxu0 0.0
      %321 = vmatprep.subr.mxu0 0.0
      %322 = vmatpush1.msra.mxu0 0.0
      %323 = vmatprep.subr.mxu0 0.0
      %324 = vmatpush1.msra.mxu0 0.0
      %325 = vmatprep.subr.mxu0 0.0
      %326 = vmatpush1.msra.mxu0 0.0
      %327 = vmatprep.subr.mxu0 0.0
      %328 = vmatpush1.msra.mxu0 0.0
      %329 = vmatprep.subr.mxu0 0.0
      %330 = vmatpush1.msra.mxu0 0.0
      %331 = vmatprep.subr.mxu0 0.0
      %332 = vmatpush1.msra.mxu0 0.0
      %333 = vmatprep.subr.mxu0 0.0
      %334 = vmatpush1.msra.mxu0 0.0
      %335 = vmatprep.subr.mxu0 0.0
      %336 = vmatpush1.msra.mxu0 0.0
      %337 = vmatprep.subr.mxu0 0.0
      %338 = vmatpush1.msra.mxu0 0.0
      %339 = vmatprep.mubr.f32.mxu0 0.0
      %340 = vmatmul.mubr.f32.gmra.mrb[0].mxu0 %v269
      %v341 = vpop.f32.mrb[0].mxu0
      %v342 = vadd.f32 %v264, %v341
      %v343 = vpop.f32.mrb[0].mxu0
      %v344 = vadd.f32 %v266, %v343
      %345 = vdwg.mxu0
      %s346 = scalar_lea.vmem %s1, 16
      %v347 = vld [vmem:[%s346] sm:$0xff]
      %348 = vrot.lane.b32.xlu0 %v171, 126
      %v349 = vpop.permute.xlu0 %348
      %350 = vrot.lane.b32.xlu0 %v178, 126
      %v351 = vpop.permute.xlu0 %350
      %352 = vrot.lane.b32.xlu0 %v172, 126
      %v353 = vpop.permute.xlu0 %352
      %vm354 = vcmask 1031168
      %v355 = vsel %vm354, %v349, %v351
      %v356 = vsel %vm354, %v351, %v353
      %v358 = vsel %vm188, %v347, 0
      %v360 = vsel %vm192, %v355, 0
      %v362 = vsel %vm192, %v356, 0
      %364 = vmatprep.subr.mxu0 %v362
      %365 = vmatpush1.msra.mxu0 %v360
      %366 = vmatprep.subr.mxu0 0.0
      %367 = vmatpush1.msra.mxu0 0.0
      %368 = vmatprep.subr.mxu0 0.0
      %369 = vmatpush1.msra.mxu0 0.0
      %370 = vmatprep.subr.mxu0 0.0
      %371 = vmatpush1.msra.mxu0 0.0
      %372 = vmatprep.subr.mxu0 0.0
      %373 = vmatpush1.msra.mxu0 0.0
      %374 = vmatprep.subr.mxu0 0.0
      %375 = vmatpush1.msra.mxu0 0.0
      %376 = vmatprep.subr.mxu0 0.0
      %377 = vmatpush1.msra.mxu0 0.0
      %378 = vmatprep.subr.mxu0 0.0
      %379 = vmatpush1.msra.mxu0 0.0
      %380 = vmatprep.subr.mxu0 0.0
      %381 = vmatpush1.msra.mxu0 0.0
      %382 = vmatprep.subr.mxu0 0.0
      %383 = vmatpush1.msra.mxu0 0.0
      %384 = vmatprep.subr.mxu0 0.0
      %385 = vmatpush1.msra.mxu0 0.0
      %386 = vmatprep.subr.mxu0 0.0
      %387 = vmatpush1.msra.mxu0 0.0
      %388 = vmatprep.subr.mxu0 0.0
      %389 = vmatpush1.msra.mxu0 0.0
      %390 = vmatprep.subr.mxu0 0.0
      %391 = vmatpush1.msra.mxu0 0.0
      %392 = vmatprep.subr.mxu0 0.0
      %393 = vmatpush1.msra.mxu0 0.0
      %394 = vmatprep.subr.mxu0 0.0
      %395 = vmatpush1.msra.mxu0 0.0
      %396 = vmatprep.subr.mxu0 0.0
      %397 = vmatpush1.msra.mxu0 0.0
      %398 = vmatprep.subr.mxu0 0.0
      %399 = vmatpush1.msra.mxu0 0.0
      %400 = vmatprep.subr.mxu0 0.0
      %401 = vmatpush1.msra.mxu0 0.0
      %402 = vmatprep.subr.mxu0 0.0
      %403 = vmatpush1.msra.mxu0 0.0
      %404 = vmatprep.subr.mxu0 0.0
      %405 = vmatpush1.msra.mxu0 0.0
      %406 = vmatprep.subr.mxu0 0.0
      %407 = vmatpush1.msra.mxu0 0.0
      %408 = vmatprep.subr.mxu0 0.0
      %409 = vmatpush1.msra.mxu0 0.0
      %410 = vmatprep.subr.mxu0 0.0
      %411 = vmatpush1.msra.mxu0 0.0
      %412 = vmatprep.subr.mxu0 0.0
      %413 = vmatpush1.msra.mxu0 0.0
      %414 = vmatprep.subr.mxu0 0.0
      %415 = vmatpush1.msra.mxu0 0.0
      %416 = vmatprep.subr.mxu0 0.0
      %417 = vmatpush1.msra.mxu0 0.0
      %418 = vmatprep.subr.mxu0 0.0
      %419 = vmatpush1.msra.mxu0 0.0
      %420 = vmatprep.subr.mxu0 0.0
      %421 = vmatpush1.msra.mxu0 0.0
      %422 = vmatprep.subr.mxu0 0.0
      %423 = vmatpush1.msra.mxu0 0.0
      %424 = vmatprep.subr.mxu0 0.0
      %425 = vmatpush1.msra.mxu0 0.0
      %426 = vmatprep.subr.mxu0 0.0
      %427 = vmatpush1.msra.mxu0 0.0
      %428 = vmatprep.mubr.f32.mxu0 0.0
      %429 = vmatmul.mubr.f32.gmra.mrb[0].mxu0 %v358
      %v430 = vpop.f32.mrb[0].mxu0
      %v431 = vadd.f32 0.0, %v430
      %v432 = vpop.f32.mrb[0].mxu0
      %v433 = vadd.f32 0.0, %v432
      %434 = vdwg.mxu0
      %v435 = vadd.f32 %v342, %v431
      %v436 = vadd.f32 %v344, %v433
      %s437 = scalar_lea.vmem %s1, 24
      %v438 = vld [vmem:[%s437] sm:$0xff]
      %439 = vrot.lane.b32.xlu0 %v171, 112
      %v440 = vpop.permute.xlu0 %439
      %441 = vrot.lane.b32.xlu0 %v178, 112
      %v442 = vpop.permute.xlu0 %441
      %443 = vrot.lane.b32.xlu0 %v172, 112
      %v444 = vpop.permute.xlu0 %443
      %vm445 = vcmask 916480
      %v446 = vsel %vm445, %v440, %v442
      %v447 = vsel %vm445, %v442, %v444
      %v449 = vsel %vm188, %v438, 0
      %v451 = vsel %vm192, %v446, 0
      %v453 = vsel %vm192, %v447, 0
      %455 = vmatprep.subr.mxu0 %v453
      %456 = vmatpush1.msra.mxu0 %v451
      %457 = vmatprep.subr.mxu0 0.0
      %458 = vmatpush1.msra.mxu0 0.0
      %459 = vmatprep.subr.mxu0 0.0
      %460 = vmatpush1.msra.mxu0 0.0
      %461 = vmatprep.subr.mxu0 0.0
      %462 = vmatpush1.msra.mxu0 0.0
      %463 = vmatprep.subr.mxu0 0.0
      %464 = vmatpush1.msra.mxu0 0.0
      %465 = vmatprep.subr.mxu0 0.0
      %466 = vmatpush1.msra.mxu0 0.0
      %467 = vmatprep.subr.mxu0 0.0
      %468 = vmatpush1.msra.mxu0 0.0
      %469 = vmatprep.subr.mxu0 0.0
      %470 = vmatpush1.msra.mxu0 0.0
      %471 = vmatprep.subr.mxu0 0.0
      %472 = vmatpush1.msra.mxu0 0.0
      %473 = vmatprep.subr.mxu0 0.0
      %474 = vmatpush1.msra.mxu0 0.0
      %475 = vmatprep.subr.mxu0 0.0
      %476 = vmatpush1.msra.mxu0 0.0
      %477 = vmatprep.subr.mxu0 0.0
      %478 = vmatpush1.msra.mxu0 0.0
      %479 = vmatprep.subr.mxu0 0.0
      %480 = vmatpush1.msra.mxu0 0.0
      %481 = vmatprep.subr.mxu0 0.0
      %482 = vmatpush1.msra.mxu0 0.0
      %483 = vmatprep.subr.mxu0 0.0
      %484 = vmatpush1.msra.mxu0 0.0
      %485 = vmatprep.subr.mxu0 0.0
      %486 = vmatpush1.msra.mxu0 0.0
      %487 = vmatprep.subr.mxu0 0.0
      %488 = vmatpush1.msra.mxu0 0.0
      %489 = vmatprep.subr.mxu0 0.0
      %490 = vmatpush1.msra.mxu0 0.0
      %491 = vmatprep.subr.mxu0 0.0
      %492 = vmatpush1.msra.mxu0 0.0
      %493 = vmatprep.subr.mxu0 0.0
      %494 = vmatpush1.msra.mxu0 0.0
      %495 = vmatprep.subr.mxu0 0.0
      %496 = vmatpush1.msra.mxu0 0.0
      %497 = vmatprep.subr.mxu0 0.0
      %498 = vmatpush1.msra.mxu0 0.0
      %499 = vmatprep.subr.mxu0 0.0
      %500 = vmatpush1.msra.mxu0 0.0
      %501 = vmatprep.subr.mxu0 0.0
      %502 = vmatpush1.msra.mxu0 0.0
      %503 = vmatprep.subr.mxu0 0.0
      %504 = vmatpush1.msra.mxu0 0.0
      %505 = vmatprep.subr.mxu0 0.0
      %506 = vmatpush1.msra.mxu0 0.0
      %507 = vmatprep.subr.mxu0 0.0
      %508 = vmatpush1.msra.mxu0 0.0
      %509 = vmatprep.subr.mxu0 0.0
      %510 = vmatpush1.msra.mxu0 0.0
      %511 = vmatprep.subr.mxu0 0.0
      %512 = vmatpush1.msra.mxu0 0.0
      %513 = vmatprep.subr.mxu0 0.0
      %514 = vmatpush1.msra.mxu0 0.0
      %515 = vmatprep.subr.mxu0 0.0
      %516 = vmatpush1.msra.mxu0 0.0
      %517 = vmatprep.subr.mxu0 0.0
      %518 = vmatpush1.msra.mxu0 0.0
      %519 = vmatprep.mubr.f32.mxu0 0.0
      %520 = vmatmul.mubr.f32.gmra.mrb[0].mxu0 %v449
      %v521 = vpop.f32.mrb[0].mxu0
      %v522 = vadd.f32 0.0, %v521
      %v523 = vpop.f32.mrb[0].mxu0
      %v524 = vadd.f32 0.0, %v523
      %525 = vdwg.mxu0
      %v526 = vadd.f32 %v435, %v522
      %v527 = vadd.f32 %v436, %v524
      %s528 = scalar_lea.vmem %s1, 32
      %v529 = vld [vmem:[%s528] sm:$0xff]
      %530 = vrot.lane.b32.xlu0 %v171, 111
      %v531 = vpop.permute.xlu0 %530
      %532 = vrot.lane.b32.xlu0 %v178, 111
      %v533 = vpop.permute.xlu0 %532
      %534 = vrot.lane.b32.xlu0 %v172, 111
      %v535 = vpop.permute.xlu0 %534
      %vm536 = vcmask 908288
      %v537 = vsel %vm536, %v531, %v533
      %v538 = vsel %vm536, %v533, %v535
      %v540 = vsel %vm188, %v529, 0
      %v542 = vsel %vm192, %v537, 0
      %v544 = vsel %vm192, %v538, 0
      %546 = vmatprep.subr.mxu0 %v544
      %547 = vmatpush1.msra.mxu0 %v542
      %548 = vmatprep.subr.mxu0 0.0
      %549 = vmatpush1.msra.mxu0 0.0
      %550 = vmatprep.subr.mxu0 0.0
      %551 = vmatpush1.msra.mxu0 0.0
      %552 = vmatprep.subr.mxu0 0.0
      %553 = vmatpush1.msra.mxu0 0.0
      %554 = vmatprep.subr.mxu0 0.0
      %555 = vmatpush1.msra.mxu0 0.0
      %556 = vmatprep.subr.mxu0 0.0
      %557 = vmatpush1.msra.mxu0 0.0
      %558 = vmatprep.subr.mxu0 0.0
      %559 = vmatpush1.msra.mxu0 0.0
      %560 = vmatprep.subr.mxu0 0.0
      %561 = vmatpush1.msra.mxu0 0.0
      %562 = vmatprep.subr.mxu0 0.0
      %563 = vmatpush1.msra.mxu0 0.0
      %564 = vmatprep.subr.mxu0 0.0
      %565 = vmatpush1.msra.mxu0 0.0
      %566 = vmatprep.subr.mxu0 0.0
      %567 = vmatpush1.msra.mxu0 0.0
      %568 = vmatprep.subr.mxu0 0.0
      %569 = vmatpush1.msra.mxu0 0.0
      %570 = vmatprep.subr.mxu0 0.0
      %571 = vmatpush1.msra.mxu0 0.0
      %572 = vmatprep.subr.mxu0 0.0
      %573 = vmatpush1.msra.mxu0 0.0
      %574 = vmatprep.subr.mxu0 0.0
      %575 = vmatpush1.msra.mxu0 0.0
      %576 = vmatprep.subr.mxu0 0.0
      %577 = vmatpush1.msra.mxu0 0.0
      %578 = vmatprep.subr.mxu0 0.0
      %579 = vmatpush1.msra.mxu0 0.0
      %580 = vmatprep.subr.mxu0 0.0
      %581 = vmatpush1.msra.mxu0 0.0
      %582 = vmatprep.subr.mxu0 0.0
      %583 = vmatpush1.msra.mxu0 0.0
      %584 = vmatprep.subr.mxu0 0.0
      %585 = vmatpush1.msra.mxu0 0.0
      %586 = vmatprep.subr.mxu0 0.0
      %587 = vmatpush1.msra.mxu0 0.0
      %588 = vmatprep.subr.mxu0 0.0
      %589 = vmatpush1.msra.mxu0 0.0
      %590 = vmatprep.subr.mxu0 0.0
      %591 = vmatpush1.msra.mxu0 0.0
      %592 = vmatprep.subr.mxu0 0.0
      %593 = vmatpush1.msra.mxu0 0.0
      %594 = vmatprep.subr.mxu0 0.0
      %595 = vmatpush1.msra.mxu0 0.0
      %596 = vmatprep.subr.mxu0 0.0
      %597 = vmatpush1.msra.mxu0 0.0
      %598 = vmatprep.subr.mxu0 0.0
      %599 = vmatpush1.msra.mxu0 0.0
      %600 = vmatprep.subr.mxu0 0.0
      %601 = vmatpush1.msra.mxu0 0.0
      %602 = vmatprep.subr.mxu0 0.0
      %603 = vmatpush1.msra.mxu0 0.0
      %604 = vmatprep.subr.mxu0 0.0
      %605 = vmatpush1.msra.mxu0 0.0
      %606 = vmatprep.subr.mxu0 0.0
      %607 = vmatpush1.msra.mxu0 0.0
      %608 = vmatprep.subr.mxu0 0.0
      %609 = vmatpush1.msra.mxu0 0.0
      %610 = vmatprep.mubr.f32.mxu0 0.0
      %611 = vmatmul.mubr.f32.gmra.mrb[0].mxu0 %v540
      %v612 = vpop.f32.mrb[0].mxu0
      %v613 = vadd.f32 0.0, %v612
      %v614 = vpop.f32.mrb[0].mxu0
      %v615 = vadd.f32 0.0, %v614
      %616 = vdwg.mxu0
      %v617 = vadd.f32 %v526, %v613
      %v618 = vadd.f32 %v527, %v615
      %s619 = scalar_lea.vmem %s1, 40
      %v620 = vld [vmem:[%s619] sm:$0xff]
      %621 = vrot.lane.b32.xlu0 %v171, 110
      %v622 = vpop.permute.xlu0 %621
      %623 = vrot.lane.b32.xlu0 %v178, 110
      %v624 = vpop.permute.xlu0 %623
      %625 = vrot.lane.b32.xlu0 %v172, 110
      %v626 = vpop.permute.xlu0 %625
      %vm627 = vcmask 900096
      %v628 = vsel %vm627, %v622, %v624
      %v629 = vsel %vm627, %v624, %v626
      %v631 = vsel %vm188, %v620, 0
      %v633 = vsel %vm192, %v628, 0
      %v635 = vsel %vm192, %v629, 0
      %637 = vmatprep.subr.mxu0 %v635
      %638 = vmatpush1.msra.mxu0 %v633
      %639 = vmatprep.subr.mxu0 0.0
      %640 = vmatpush1.msra.mxu0 0.0
      %641 = vmatprep.subr.mxu0 0.0
      %642 = vmatpush1.msra.mxu0 0.0
      %643 = vmatprep.subr.mxu0 0.0
      %644 = vmatpush1.msra.mxu0 0.0
      %645 = vmatprep.subr.mxu0 0.0
      %646 = vmatpush1.msra.mxu0 0.0
      %647 = vmatprep.subr.mxu0 0.0
      %648 = vmatpush1.msra.mxu0 0.0
      %649 = vmatprep.subr.mxu0 0.0
      %650 = vmatpush1.msra.mxu0 0.0
      %651 = vmatprep.subr.mxu0 0.0
      %652 = vmatpush1.msra.mxu0 0.0
      %653 = vmatprep.subr.mxu0 0.0
      %654 = vmatpush1.msra.mxu0 0.0
      %655 = vmatprep.subr.mxu0 0.0
      %656 = vmatpush1.msra.mxu0 0.0
      %657 = vmatprep.subr.mxu0 0.0
      %658 = vmatpush1.msra.mxu0 0.0
      %659 = vmatprep.subr.mxu0 0.0
      %660 = vmatpush1.msra.mxu0 0.0
      %661 = vmatprep.subr.mxu0 0.0
      %662 = vmatpush1.msra.mxu0 0.0
      %663 = vmatprep.subr.mxu0 0.0
      %664 = vmatpush1.msra.mxu0 0.0
      %665 = vmatprep.subr.mxu0 0.0
      %666 = vmatpush1.msra.mxu0 0.0
      %667 = vmatprep.subr.mxu0 0.0
      %668 = vmatpush1.msra.mxu0 0.0
      %669 = vmatprep.subr.mxu0 0.0
      %670 = vmatpush1.msra.mxu0 0.0
      %671 = vmatprep.subr.mxu0 0.0
      %672 = vmatpush1.msra.mxu0 0.0
      %673 = vmatprep.subr.mxu0 0.0
      %674 = vmatpush1.msra.mxu0 0.0
      %675 = vmatprep.subr.mxu0 0.0
      %676 = vmatpush1.msra.mxu0 0.0
      %677 = vmatprep.subr.mxu0 0.0
      %678 = vmatpush1.msra.mxu0 0.0
      %679 = vmatprep.subr.mxu0 0.0
      %680 = vmatpush1.msra.mxu0 0.0
      %681 = vmatprep.subr.mxu0 0.0
      %682 = vmatpush1.msra.mxu0 0.0
      %683 = vmatprep.subr.mxu0 0.0
      %684 = vmatpush1.msra.mxu0 0.0
      %685 = vmatprep.subr.mxu0 0.0
      %686 = vmatpush1.msra.mxu0 0.0
      %687 = vmatprep.subr.mxu0 0.0
      %688 = vmatpush1.msra.mxu0 0.0
      %689 = vmatprep.subr.mxu0 0.0
      %690 = vmatpush1.msra.mxu0 0.0
      %691 = vmatprep.subr.mxu0 0.0
      %692 = vmatpush1.msra.mxu0 0.0
      %693 = vmatprep.subr.mxu0 0.0
      %694 = vmatpush1.msra.mxu0 0.0
      %695 = vmatprep.subr.mxu0 0.0
      %696 = vmatpush1.msra.mxu0 0.0
      %697 = vmatprep.subr.mxu0 0.0
      %698 = vmatpush1.msra.mxu0 0.0
      %699 = vmatprep.subr.mxu0 0.0
      %700 = vmatpush1.msra.mxu0 0.0
      %701 = vmatprep.mubr.f32.mxu0 0.0
      %702 = vmatmul.mubr.f32.gmra.mrb[0].mxu0 %v631
      %v703 = vpop.f32.mrb[0].mxu0
      %v704 = vadd.f32 0.0, %v703
      %v705 = vpop.f32.mrb[0].mxu0
      %v706 = vadd.f32 0.0, %v705
      %707 = vdwg.mxu0
      %v708 = vadd.f32 %v617, %v704
      %v709 = vadd.f32 %v618, %v706
      %s710 = scalar_lea.vmem %s1, 48
      %v711 = vld [vmem:[%s710] sm:$0xff]
      %712 = vrot.lane.b32.xlu0 %v171, 96
      %v713 = vpop.permute.xlu0 %712
      %714 = vrot.lane.b32.xlu0 %v178, 96
      %v715 = vpop.permute.xlu0 %714
      %716 = vrot.lane.b32.xlu0 %v172, 96
      %v717 = vpop.permute.xlu0 %716
      %vm718 = vcmask 785408
      %v719 = vsel %vm718, %v713, %v715
      %v720 = vsel %vm718, %v715, %v717
      %v722 = vsel %vm188, %v711, 0
      %v724 = vsel %vm192, %v719, 0
      %v726 = vsel %vm192, %v720, 0
      %728 = vmatprep.subr.mxu0 %v726
      %729 = vmatpush1.msra.mxu0 %v724
      %730 = vmatprep.subr.mxu0 0.0
      %731 = vmatpush1.msra.mxu0 0.0
      %732 = vmatprep.subr.mxu0 0.0
      %733 = vmatpush1.msra.mxu0 0.0
      %734 = vmatprep.subr.mxu0 0.0
      %735 = vmatpush1.msra.mxu0 0.0
      %736 = vmatprep.subr.mxu0 0.0
      %737 = vmatpush1.msra.mxu0 0.0
      %738 = vmatprep.subr.mxu0 0.0
      %739 = vmatpush1.msra.mxu0 0.0
      %740 = vmatprep.subr.mxu0 0.0
      %741 = vmatpush1.msra.mxu0 0.0
      %742 = vmatprep.subr.mxu0 0.0
      %743 = vmatpush1.msra.mxu0 0.0
      %744 = vmatprep.subr.mxu0 0.0
      %745 = vmatpush1.msra.mxu0 0.0
      %746 = vmatprep.subr.mxu0 0.0
      %747 = vmatpush1.msra.mxu0 0.0
      %748 = vmatprep.subr.mxu0 0.0
      %749 = vmatpush1.msra.mxu0 0.0
      %750 = vmatprep.subr.mxu0 0.0
      %751 = vmatpush1.msra.mxu0 0.0
      %752 = vmatprep.subr.mxu0 0.0
      %753 = vmatpush1.msra.mxu0 0.0
      %754 = vmatprep.subr.mxu0 0.0
      %755 = vmatpush1.msra.mxu0 0.0
      %756 = vmatprep.subr.mxu0 0.0
      %757 = vmatpush1.msra.mxu0 0.0
      %758 = vmatprep.subr.mxu0 0.0
      %759 = vmatpush1.msra.mxu0 0.0
      %760 = vmatprep.subr.mxu0 0.0
      %761 = vmatpush1.msra.mxu0 0.0
      %762 = vmatprep.subr.mxu0 0.0
      %763 = vmatpush1.msra.mxu0 0.0
      %764 = vmatprep.subr.mxu0 0.0
      %765 = vmatpush1.msra.mxu0 0.0
      %766 = vmatprep.subr.mxu0 0.0
      %767 = vmatpush1.msra.mxu0 0.0
      %768 = vmatprep.subr.mxu0 0.0
      %769 = vmatpush1.msra.mxu0 0.0
      %770 = vmatprep.subr.mxu0 0.0
      %771 = vmatpush1.msra.mxu0 0.0
      %772 = vmatprep.subr.mxu0 0.0
      %773 = vmatpush1.msra.mxu0 0.0
      %774 = vmatprep.subr.mxu0 0.0
      %775 = vmatpush1.msra.mxu0 0.0
      %776 = vmatprep.subr.mxu0 0.0
      %777 = vmatpush1.msra.mxu0 0.0
      %778 = vmatprep.subr.mxu0 0.0
      %779 = vmatpush1.msra.mxu0 0.0
      %780 = vmatprep.subr.mxu0 0.0
      %781 = vmatpush1.msra.mxu0 0.0
      %782 = vmatprep.subr.mxu0 0.0
      %783 = vmatpush1.msra.mxu0 0.0
      %784 = vmatprep.subr.mxu0 0.0
      %785 = vmatpush1.msra.mxu0 0.0
      %786 = vmatprep.subr.mxu0 0.0
      %787 = vmatpush1.msra.mxu0 0.0
      %788 = vmatprep.subr.mxu0 0.0
      %789 = vmatpush1.msra.mxu0 0.0
      %790 = vmatprep.subr.mxu0 0.0
      %791 = vmatpush1.msra.mxu0 0.0
      %792 = vmatprep.mubr.f32.mxu0 0.0
      %793 = vmatmul.mubr.f32.gmra.mrb[0].mxu0 %v722
      %v794 = vpop.f32.mrb[0].mxu0
      %v795 = vadd.f32 0.0, %v794
      %v796 = vpop.f32.mrb[0].mxu0
      %v797 = vadd.f32 0.0, %v796
      %798 = vdwg.mxu0
      %v799 = vadd.f32 %v708, %v795
      %v800 = vadd.f32 %v709, %v797
      %s801 = scalar_lea.vmem %s1, 56
      %v802 = vld [vmem:[%s801] sm:$0xff]
      %803 = vrot.lane.b32.xlu0 %v171, 95
      %v804 = vpop.permute.xlu0 %803
      %805 = vrot.lane.b32.xlu0 %v178, 95
      %v806 = vpop.permute.xlu0 %805
      %807 = vrot.lane.b32.xlu0 %v172, 95
      %v808 = vpop.permute.xlu0 %807
      %vm809 = vcmask 777216
      %v810 = vsel %vm809, %v804, %v806
      %v811 = vsel %vm809, %v806, %v808
      %v813 = vsel %vm188, %v802, 0
      %v815 = vsel %vm192, %v810, 0
      %v817 = vsel %vm192, %v811, 0
      %819 = vmatprep.subr.mxu0 %v817
      %820 = vmatpush1.msra.mxu0 %v815
      %821 = vmatprep.subr.mxu0 0.0
      %822 = vmatpush1.msra.mxu0 0.0
      %823 = vmatprep.subr.mxu0 0.0
      %824 = vmatpush1.msra.mxu0 0.0
      %825 = vmatprep.subr.mxu0 0.0
      %826 = vmatpush1.msra.mxu0 0.0
      %827 = vmatprep.subr.mxu0 0.0
      %828 = vmatpush1.msra.mxu0 0.0
      %829 = vmatprep.subr.mxu0 0.0
      %830 = vmatpush1.msra.mxu0 0.0
      %831 = vmatprep.subr.mxu0 0.0
      %832 = vmatpush1.msra.mxu0 0.0
      %833 = vmatprep.subr.mxu0 0.0
      %834 = vmatpush1.msra.mxu0 0.0
      %835 = vmatprep.subr.mxu0 0.0
      %836 = vmatpush1.msra.mxu0 0.0
      %837 = vmatprep.subr.mxu0 0.0
      %838 = vmatpush1.msra.mxu0 0.0
      %839 = vmatprep.subr.mxu0 0.0
      %840 = vmatpush1.msra.mxu0 0.0
      %841 = vmatprep.subr.mxu0 0.0
      %842 = vmatpush1.msra.mxu0 0.0
      %843 = vmatprep.subr.mxu0 0.0
      %844 = vmatpush1.msra.mxu0 0.0
      %845 = vmatprep.subr.mxu0 0.0
      %846 = vmatpush1.msra.mxu0 0.0
      %847 = vmatprep.subr.mxu0 0.0
      %848 = vmatpush1.msra.mxu0 0.0
      %849 = vmatprep.subr.mxu0 0.0
      %850 = vmatpush1.msra.mxu0 0.0
      %851 = vmatprep.subr.mxu0 0.0
      %852 = vmatpush1.msra.mxu0 0.0
      %853 = vmatprep.subr.mxu0 0.0
      %854 = vmatpush1.msra.mxu0 0.0
      %855 = vmatprep.subr.mxu0 0.0
      %856 = vmatpush1.msra.mxu0 0.0
      %857 = vmatprep.subr.mxu0 0.0
      %858 = vmatpush1.msra.mxu0 0.0
      %859 = vmatprep.subr.mxu0 0.0
      %860 = vmatpush1.msra.mxu0 0.0
      %861 = vmatprep.subr.mxu0 0.0
      %862 = vmatpush1.msra.mxu0 0.0
      %863 = vmatprep.subr.mxu0 0.0
      %864 = vmatpush1.msra.mxu0 0.0
      %865 = vmatprep.subr.mxu0 0.0
      %866 = vmatpush1.msra.mxu0 0.0
      %867 = vmatprep.subr.mxu0 0.0
      %868 = vmatpush1.msra.mxu0 0.0
      %869 = vmatprep.subr.mxu0 0.0
      %870 = vmatpush1.msra.mxu0 0.0
      %871 = vmatprep.subr.mxu0 0.0
      %872 = vmatpush1.msra.mxu0 0.0
      %873 = vmatprep.subr.mxu0 0.0
      %874 = vmatpush1.msra.mxu0 0.0
      %875 = vmatprep.subr.mxu0 0.0
      %876 = vmatpush1.msra.mxu0 0.0
      %877 = vmatprep.subr.mxu0 0.0
      %878 = vmatpush1.msra.mxu0 0.0
      %879 = vmatprep.subr.mxu0 0.0
      %880 = vmatpush1.msra.mxu0 0.0
      %881 = vmatprep.subr.mxu0 0.0
      %882 = vmatpush1.msra.mxu0 0.0
      %883 = vmatprep.mubr.f32.mxu0 0.0
      %884 = vmatmul.mubr.f32.gmra.mrb[0].mxu0 %v813
      %v885 = vpop.f32.mrb[0].mxu0
      %v886 = vadd.f32 0.0, %v885
      %v887 = vpop.f32.mrb[0].mxu0
      %v888 = vadd.f32 0.0, %v887
      %889 = vdwg.mxu0
      %v890 = vadd.f32 %v799, %v886
      %v891 = vadd.f32 %v800, %v888
      %s892 = scalar_lea.vmem %s1, 64
      %v893 = vld [vmem:[%s892] sm:$0xff]
      %894 = vrot.lane.b32.xlu0 %v171, 94
      %v895 = vpop.permute.xlu0 %894
      %896 = vrot.lane.b32.xlu0 %v178, 94
      %v897 = vpop.permute.xlu0 %896
      %898 = vrot.lane.b32.xlu0 %v172, 94
      %v899 = vpop.permute.xlu0 %898
      %vm900 = vcmask 769024
      %v901 = vsel %vm900, %v895, %v897
      %v902 = vsel %vm900, %v897, %v899
      %v904 = vsel %vm188, %v893, 0
      %v906 = vsel %vm192, %v901, 0
      %v908 = vsel %vm192, %v902, 0
      %910 = vmatprep.subr.mxu0 %v908
      %911 = vmatpush1.msra.mxu0 %v906
      %912 = vmatprep.subr.mxu0 0.0
      %913 = vmatpush1.msra.mxu0 0.0
      %914 = vmatprep.subr.mxu0 0.0
      %915 = vmatpush1.msra.mxu0 0.0
      %916 = vmatprep.subr.mxu0 0.0
      %917 = vmatpush1.msra.mxu0 0.0
      %918 = vmatprep.subr.mxu0 0.0
      %919 = vmatpush1.msra.mxu0 0.0
      %920 = vmatprep.subr.mxu0 0.0
      %921 = vmatpush1.msra.mxu0 0.0
      %922 = vmatprep.subr.mxu0 0.0
      %923 = vmatpush1.msra.mxu0 0.0
      %924 = vmatprep.subr.mxu0 0.0
      %925 = vmatpush1.msra.mxu0 0.0
      %926 = vmatprep.subr.mxu0 0.0
      %927 = vmatpush1.msra.mxu0 0.0
      %928 = vmatprep.subr.mxu0 0.0
      %929 = vmatpush1.msra.mxu0 0.0
      %930 = vmatprep.subr.mxu0 0.0
      %931 = vmatpush1.msra.mxu0 0.0
      %932 = vmatprep.subr.mxu0 0.0
      %933 = vmatpush1.msra.mxu0 0.0
      %934 = vmatprep.subr.mxu0 0.0
      %935 = vmatpush1.msra.mxu0 0.0
      %936 = vmatprep.subr.mxu0 0.0
      %937 = vmatpush1.msra.mxu0 0.0
      %938 = vmatprep.subr.mxu0 0.0
      %939 = vmatpush1.msra.mxu0 0.0
      %940 = vmatprep.subr.mxu0 0.0
      %941 = vmatpush1.msra.mxu0 0.0
      %942 = vmatprep.subr.mxu0 0.0
      %943 = vmatpush1.msra.mxu0 0.0
      %944 = vmatprep.subr.mxu0 0.0
      %945 = vmatpush1.msra.mxu0 0.0
      %946 = vmatprep.subr.mxu0 0.0
      %947 = vmatpush1.msra.mxu0 0.0
      %948 = vmatprep.subr.mxu0 0.0
      %949 = vmatpush1.msra.mxu0 0.0
      %950 = vmatprep.subr.mxu0 0.0
      %951 = vmatpush1.msra.mxu0 0.0
      %952 = vmatprep.subr.mxu0 0.0
      %953 = vmatpush1.msra.mxu0 0.0
      %954 = vmatprep.subr.mxu0 0.0
      %955 = vmatpush1.msra.mxu0 0.0
      %956 = vmatprep.subr.mxu0 0.0
      %957 = vmatpush1.msra.mxu0 0.0
      %958 = vmatprep.subr.mxu0 0.0
      %959 = vmatpush1.msra.mxu0 0.0
      %960 = vmatprep.subr.mxu0 0.0
      %961 = vmatpush1.msra.mxu0 0.0
      %962 = vmatprep.subr.mxu0 0.0
      %963 = vmatpush1.msra.mxu0 0.0
      %964 = vmatprep.subr.mxu0 0.0
      %965 = vmatpush1.msra.mxu0 0.0
      %966 = vmatprep.subr.mxu0 0.0
      %967 = vmatpush1.msra.mxu0 0.0
      %968 = vmatprep.subr.mxu0 0.0
      %969 = vmatpush1.msra.mxu0 0.0
      %970 = vmatprep.subr.mxu0 0.0
      %971 = vmatpush1.msra.mxu0 0.0
      %972 = vmatprep.subr.mxu0 0.0
      %973 = vmatpush1.msra.mxu0 0.0
      %974 = vmatprep.mubr.f32.mxu0 0.0
      %975 = vmatmul.mubr.f32.gmra.mrb[0].mxu0 %v904
      %v976 = vpop.f32.mrb[0].mxu0
      %v977 = vadd.f32 0.0, %v976
      %v978 = vpop.f32.mrb[0].mxu0
      %v979 = vadd.f32 0.0, %v978
      %980 = vdwg.mxu0
      %v981 = vadd.f32 %v890, %v977
      %v982 = vadd.f32 %v891, %v979
      %v983 = vld [vmem:[%s2] sm:$0xff]
      %985 = vset.pattern.permute.xlu0 0
      %986 = vperm.xlu0 %985, %v983
      %v987 = vpop.permute.xlu0 %986
      %v989 = vadd.f32 %v981, %v987
      %v990 = vadd.f32 %v982, %v987
      %v991 = vmax.f32 %v989, 0.0
      %v992 = vmax.f32 %v990, 0.0
      %v993 = vand.u32 2147483647, %v989
      %v994 = vand.u32 2147483647, %v990
      %v995 = vsub.f32 0.0, %v993
      %v996 = vsub.f32 0.0, %v994
      %v997 = vmul.f32 %v995, 1.442695
      %v998 = vpow.pop %v997
      %v999 = vmul.f32 %v996, 1.442695
      %v1000 = vpow.pop %v999
      %v1001 = vadd.f32 %v998, 1.0
      %v1002 = vlog2.pop %v1001
      %v1003 = vmul.f32 %v1002, 0.6931472
      %v1004 = vmul.f32 -0.5, %v998
      %v1005 = vadd.f32 %v1004, 1.0
      %v1006 = vmul.f32 %v1005, %v998
      %v1007 = vand.u32 2147483647, %v998
      %vm1008 = vcmp.lt.f32.partialorder %v1007, 0.0004427343
      %v1009 = vsel %vm1008, %v1006, %v1003
      %v1010 = vadd.f32 %v1000, 1.0
      %v1011 = vlog2.pop %v1010
      %v1012 = vmul.f32 %v1011, 0.6931472
      %v1013 = vmul.f32 -0.5, %v1000
      %v1014 = vadd.f32 %v1013, 1.0
      %v1015 = vmul.f32 %v1014, %v1000
      %v1016 = vand.u32 2147483647, %v1000
      %vm1017 = vcmp.lt.f32.partialorder %v1016, 0.0004427343
      %v1018 = vsel %vm1017, %v1015, %v1012
      %v1019 = vadd.f32 %v991, %v1009
      %v1020 = vadd.f32 %v992, %v1018
      %v1021 = vtanh.pop %v1019
      %v1022 = vtanh.pop %v1020
      %v1023 = vmul.f32 %v989, %v1021
      %v1024 = vmul.f32 %v990, %v1022
      %v1025 = vmax.f32 %v1023, 0.0
      %v1026 = vmax.f32 %v1024, 0.0
      %v1027 = vand.u32 2147483647, %v1023
      %v1028 = vand.u32 2147483647, %v1024
      %v1029 = vsub.f32 0.0, %v1027
      %v1030 = vsub.f32 0.0, %v1028
      %v1031 = vmul.f32 %v1029, 1.442695
      %v1032 = vpow.pop %v1031
      %v1033 = vmul.f32 %v1030, 1.442695
      %v1034 = vpow.pop %v1033
      %v1035 = vadd.f32 %v1032, 1.0
      %v1036 = vlog2.pop %v1035
      %v1037 = vmul.f32 %v1036, 0.6931472
      %v1038 = vmul.f32 -0.5, %v1032
      %v1039 = vadd.f32 %v1038, 1.0
      %v1040 = vmul.f32 %v1039, %v1032
      %v1041 = vand.u32 2147483647, %v1032
      %vm1042 = vcmp.lt.f32.partialorder %v1041, 0.0004427343
      %v1043 = vsel %vm1042, %v1040, %v1037
      %v1044 = vadd.f32 %v1034, 1.0
      %v1045 = vlog2.pop %v1044
      %v1046 = vmul.f32 %v1045, 0.6931472
      %v1047 = vmul.f32 -0.5, %v1034
      %v1048 = vadd.f32 %v1047, 1.0
      %v1049 = vmul.f32 %v1048, %v1034
      %v1050 = vand.u32 2147483647, %v1034
      %vm1051 = vcmp.lt.f32.partialorder %v1050, 0.0004427343
      %v1052 = vsel %vm1051, %v1049, %v1046
      %v1053 = vadd.f32 %v1025, %v1043
      %v1054 = vadd.f32 %v1026, %v1052
      %v1055 = vtanh.pop %v1053
      %v1056 = vtanh.pop %v1054
      %v1057 = vmul.f32 %v1023, %v1055
      %v1058 = vmul.f32 %v1024, %v1056
      %1059 = vst [vmem:[%s170] sm:$0xff] %v1057
      %1060 = vst [vmem:[%s170 + $0x8] sm:$0xff] %v1058
      %p1061 = scmp.lt.s32.totalorder %s14, 1
      %s1062 = scalar_select %p1061, %s14, 1
      %s1063 = smul.addr %s1062, 2
      %s1064 = smul.addr %s1063, 8
      %s1065 = scalar_lea.vmem %s3, %s1064
      // Predicated region
      $region33: #{conv2d_mish_mish.1} parent=31 // pred_check
        %p1066 = pneg %p100
      $region34: #{conv2d_mish_mish.1} parent=31 // pred_check_branch
        %1068 = sbr.rel (%p1066) target = $region36
      $region35: #{conv2d_mish_mish.1} parent=31 // pred_region
        _
      $region36: #{conv2d_mish_mish.1} parent=31 // pred_fallthru
        _
    $region32: #{conv2d_mish_mish.1} parent=5 // pred_fallthru
      _
    %p1069 = scmp.le.s32.totalorder 2, %s9
    // Predicated region
    $region37: #{conv2d_mish_mish.1} parent=5 // pred_check
      %p1070 = pneg %p1069
    $region38: #{conv2d_mish_mish.1} parent=5 // pred_check_branch
      %1072 = sbr.rel (%p1070) target = $region40
    $region39: #{conv2d_mish_mish.1} parent=5 // pred_region
      %s1073 = ssub.s32 %s9, 2
      // Predicated region
      $region41: #{conv2d_mish_mish.1} parent=39 // pred_check
        %p1074 = pneg %p106
      $region42: #{conv2d_mish_mish.1} parent=39 // pred_check_branch
        %1076 = sbr.rel (%p1074) target = $region44
      $region43: #{conv2d_mish_mish.1} parent=39 // pred_region
        %p1077 = scmp.lt.s32.totalorder %s15, 1
        %s1078 = scalar_select %p1077, %s15, 1
        %s1079 = smul.addr %s1078, 2
        %s1080 = smul.addr %s1079, 8
        %s1081 = scalar_lea.vmem %s3, %s1080
      $region44: #{conv2d_mish_mish.1} parent=39 // pred_fallthru
        _
    $region40: #{conv2d_mish_mish.1} parent=5 // pred_fallthru
      _
  $region6: #{conv2d_mish_mish.1} parent=0 // loop_footer
    %s13 = sadd.s32 1, %s9
  $region7: #{conv2d_mish_mish.1} parent=0 // loop_footer_branch
    %8 = sbr.rel target = $region3
  $region8: #{conv2d_mish_mish.1} parent=0 // loop_exit
    _

</llo_original>
